<compile_context>
chip_gen: v6e
topology: v6e:2x2x1
jax: 0.10.0
libtpu: 0.0.40
codegen_flags: <defaults>
</compile_context>

<pallas_src>
import jax
import jax.numpy as jnp
from jax.experimental import pallas as pl
from jax.experimental.pallas import tpu as pltpu


def _round_up(a: int, m: int) -> int:
    return ((a + m - 1) // m) * m


def _target_tile_bytes() -> int:
    """Per-generation streaming tile size, kept inside default scoped-VMEM limits."""
    try:
        kind = jax.devices()[0].device_kind.lower()
    except Exception:
        return 2 << 20
    if any(tag in kind for tag in ("v6", "v7", "7x")):
        return 4 << 20   # v6e/v7x: 32 MiB scoped default -> 4 MiB tiles, 16 MiB d-buffered
    return 2 << 20       # v5e / older / unknown: 16 MiB scoped default -> stay at 2 MiB


def _linreg_kernel(w_ref, b_ref, x_ref, o_ref):
    # w_ref / b_ref: (1, 1) SMEM scalars; x_ref / o_ref: (tm, lanes) VMEM tiles.
    w = w_ref[0, 0]
    b = b_ref[0, 0]
    o_ref[...] = (w * x_ref[...] + b).astype(o_ref.dtype)


def linear_regression_forward(x: jax.Array, weight: jax.Array, bias: jax.Array) -> jax.Array:
    """Computes weight * x + bias (broadcasted scalar affine) with a tiled Pallas kernel."""
    orig_shape = x.shape
    flat = x.reshape(-1)
    n = flat.shape[0]
    if n == 0:
        return x

    itemsize = jnp.dtype(x.dtype).itemsize
    sublane = max(8, 32 // itemsize)            # packed-tile sublane minimum per dtype

    # Lane-dense layout with no HBM round trips whenever possible.
    n_pad = n if n % 128 == 0 else _round_up(n, 128)
    lanes = 512 if n_pad % 512 == 0 else (256 if n_pad % 256 == 0 else 128)
    if n_pad != n:
        # TODO(synk): for large ragged inputs, stream the flat array via
        # memory_space=pl.ANY + manual DMA and mask the tail in-kernel so x/y are
        # never re-materialized in HBM; ragged-and-huge is uncommon, so keep simple.
        flat = jnp.pad(flat, (0, n_pad - n))
    rows = n_pad // lanes
    x2d = flat.reshape(rows, lanes)

    # Tile height: constant tile bytes across dtypes, per-generation target size.
    tm_cap = max(sublane, (_target_tile_bytes() // (lanes * itemsize)) // sublane * sublane)
    if rows < sublane:
        tm = rows                                # full-extent block (allowed below sublane min)
    elif rows <= tm_cap:
        # Fits in a single max tile: split into two row tiles so both v7x TCs get work.
        tm = max(sublane, _round_up(pl.cdiv(rows, 2), sublane))
    else:
        tm = tm_cap
    grid = (pl.cdiv(rows, tm),)                  # at most one partial boundary tile

    w2d = jnp.asarray(weight, jnp.float32).reshape(1, 1)
    b2d = jnp.asarray(bias, jnp.float32).reshape(1, 1)

    y2d = pl.pallas_call(
        _linreg_kernel,
        out_shape=jax.ShapeDtypeStruct((rows, lanes), x.dtype),
        grid=grid,
        in_specs=[
            pl.BlockSpec(memory_space=pltpu.SMEM),          # weight scalar
            pl.BlockSpec(memory_space=pltpu.SMEM),          # bias scalar
            pl.BlockSpec((tm, lanes), lambda i: (i, 0)),    # x tile (VMEM, double-buffered)
        ],
        out_specs=pl.BlockSpec((tm, lanes), lambda i: (i, 0)),
        compiler_params=pltpu.CompilerParams(
            dimension_semantics=("parallel",),              # shard row tiles across TCs (v7x)
        ),
        cost_estimate=pl.CostEstimate(
            flops=2 * n,
            transcendentals=0,
            bytes_accessed=2 * n * itemsize,                # read x + write y
        ),
    )(w2d, b2d, x2d)

    if n_pad != n:
        return y2d.reshape(-1)[:n].reshape(orig_shape)
    return y2d.reshape(orig_shape)


if __name__ == "__main__":
    key = jax.random.PRNGKey(0)
    kx, kw, kb, kx2 = jax.random.split(key, 4)

    # Deterministic "parameters" mirroring torch.randn(1) init.
    weight = jax.random.normal(kw, (1,), dtype=jnp.float32)
    bias = jax.random.normal(kb, (1,), dtype=jnp.float32)

    # Aligned input: exercises the lossless (no pad, no slice) fast path.
    x = jax.random.normal(kx, (8, 128), dtype=jnp.float32)
    y = jax.block_until_ready(linear_regression_forward(x, weight, bias))
    y_ref = weight[0] * x + bias[0]
    assert y.shape == x.shape and y.dtype == x.dtype
    assert jnp.allclose(y, y_ref, atol=1e-6, rtol=1e-6)

    # Ragged input: exercises the minimal-pad fallback path.
    x2 = jax.random.normal(kx2, (5, 3), dtype=jnp.float32)
    y2 = jax.block_until_ready(linear_regression_forward(x2, weight, bias))
    assert y2.shape == x2.shape and y2.dtype == x2.dtype
    assert jnp.allclose(y2, weight[0] * x2 + bias[0], atol=1e-6, rtol=1e-6)

    print("KERNEL_OK")
</pallas_src>

<mosaic_0001>
module attributes {stable_mosaic.version = 11 : i64} {
  func.func @_linreg_kernel(%arg0: i32, %arg1: memref<1x1xf32, #tpu.memory_space<smem>>, %arg2: memref<1x1xf32, #tpu.memory_space<smem>>, %arg3: memref<2x512xf32, #tpu.memory_space<vmem>>, %arg4: memref<2x512xf32, #tpu.memory_space<vmem>>) attributes {dimension_semantics = [#tpu.dimension_semantics<parallel>], iteration_bounds = array<i64: 1>, scalar_prefetch = 0 : i64, scratch_operands = 0 : i64, tpu.core_type = #tpu.core_type<tc>, window_params = [{transform_indices = @transform_0, window_bounds = array<i64: 1, 1>}, {transform_indices = @transform_1, window_bounds = array<i64: 1, 1>}, {transform_indices = @transform_2, window_bounds = array<i64: 2, 512>}, {transform_indices = @transform_3, window_bounds = array<i64: 2, 512>}]} {
    %c0 = arith.constant 0 : index
    %c0_0 = arith.constant 0 : index
    %0 = memref.load %arg1[%c0, %c0_0] : memref<1x1xf32, #tpu.memory_space<smem>>
    %c0_1 = arith.constant 0 : index
    %c0_2 = arith.constant 0 : index
    %1 = memref.load %arg2[%c0_1, %c0_2] : memref<1x1xf32, #tpu.memory_space<smem>>
    %c0_3 = arith.constant 0 : index
    %c0_4 = arith.constant 0 : index
    %2 = vector.load %arg3[%c0_3, %c0_4] : memref<2x512xf32, #tpu.memory_space<vmem>>, vector<2x512xf32>
    %3 = vector.broadcast %0 : f32 to vector<2x512xf32>
    %4 = arith.mulf %3, %2 : vector<2x512xf32>
    %5 = vector.broadcast %1 : f32 to vector<2x512xf32>
    %6 = arith.addf %4, %5 : vector<2x512xf32>
    %c0_5 = arith.constant 0 : index
    %c0_6 = arith.constant 0 : index
    %7 = vector.load %arg4[%c0_5, %c0_6] : memref<2x512xf32, #tpu.memory_space<vmem>>, vector<2x512xf32>
    tpu.vector_store %arg4[%c0_5, %c0_6], %6 {strides = array<i32>} : memref<2x512xf32, #tpu.memory_space<vmem>>, vector<2x512xf32>,
    return
  }
  func.func @transform_0(%arg0: i32) -> (i32, i32) {
    %c0_i32 = arith.constant 0 : i32
    %c0_i32_0 = arith.constant 0 : i32
    %c0_i32_1 = arith.constant 0 : i32
    return %c0_i32, %c0_i32_0 : i32, i32
  }
  func.func @transform_1(%arg0: i32) -> (i32, i32) {
    %c0_i32 = arith.constant 0 : i32
    %c0_i32_0 = arith.constant 0 : i32
    %c0_i32_1 = arith.constant 0 : i32
    return %c0_i32, %c0_i32_0 : i32, i32
  }
  func.func @transform_2(%arg0: i32) -> (i32, i32) {
    %c0_i32 = arith.constant 0 : i32
    %c0_i32_0 = arith.constant 0 : i32
    return %arg0, %c0_i32 : i32, i32
  }
  func.func @transform_3(%arg0: i32) -> (i32, i32) {
    %c0_i32 = arith.constant 0 : i32
    %c0_i32_0 = arith.constant 0 : i32
    return %arg0, %c0_i32 : i32, i32
  }
}

</mosaic_0001>

<llo_original>
// kernel: tpu_custom_call.1
$region0: #{tpu_custom_call.1}
  #allocation0 [shape = 'u32[]', space=smem, size = 0x4, offset = 0x4, fixed_abs, tag = 'smem constant byte address 0x4 - core index']
  #allocation1 [shape = 'u32[144,128]{1,0:T(1,128)}', space=vmem, size = 0x12000, scoped, tag = 'internal scratch']
  #allocation2 [shape = 'f32[1,1]{1,0:T(1,128)S(6)}', space=smem, size = 0x200, scoped, tag = 'scoped memory for tpu_custom_call.1']
  #allocation3 [shape = 'f32[1,1]{1,0:T(1,128)S(6)}', space=smem, size = 0x200, scoped, tag = 'scoped memory for tpu_custom_call.1']
  %s0 = inlined_call_operand.<no memory space> [shape: f32[1,1], index: 0, kind: input, shape index: {}]
  %s1 = inlined_call_operand.<no memory space> [shape: f32[1,1], index: 1, kind: input, shape index: {}]
  %s2 = inlined_call_operand.hbm [shape: f32[2,512], index: 2, kind: input, shape index: {}]
  %s3 = inlined_call_operand.hbm [shape: f32[2,512], index: 3, kind: output, shape index: {}]
  %s4 = sld [smem:[#allocation0]]
  $region26: #{tpu_custom_call.1} parent=0
    _
  %s6 = ssub.s32 1, %s4
  %s7 = scalar_select 0, %s6, %s4
  %8 = sst [smem:[#allocation2]] %s0
  %9 = sst [smem:[#allocation3]] %s1
  $region1: #{tpu_custom_call.1} parent=0
    #allocation4 [shape = 'u8[4096]{0}', space=vmem, size = 0x1000, scoped, tag = 'input window, operand 2, single buffered']
    #allocation5 [shape = 's32[1]{0}', space=sflag, size = 0x4, scoped, tag = 'scoped memory for tpu_custom_call.1']
    #allocation6 [shape = 's32[1]{0}', space=sflag, size = 0x4, scoped, tag = 'scoped memory for tpu_custom_call.1']
    #allocation7 [shape = 'u8[4096]{0}', space=vmem, size = 0x1000, scoped, tag = 'output window, operand 0, single buffered']
    %10 = vsyncpa [#allocation5], 0
    %11 = vsyncpa [#allocation6], 0
    // Predicated region
    $region2: #{tpu_custom_call.1} parent=1 // pred_check
      _
    $region3: #{tpu_custom_call.1} parent=1 // pred_check_branch
      %13 = sbr.rel (0) target = $region5
    $region4: #{tpu_custom_call.1} parent=1 // pred_region
      _
    $region5: #{tpu_custom_call.1} parent=1 // pred_fallthru
      _
    // Predicated region
    $region6: #{tpu_custom_call.1} parent=1 // pred_check
      _
    $region7: #{tpu_custom_call.1} parent=1 // pred_check_branch
      %15 = sbr.rel (0) target = $region9
    $region8: #{tpu_custom_call.1} parent=1 // pred_region
      _
    $region9: #{tpu_custom_call.1} parent=1 // pred_fallthru
      _
    // Predicated region
    $region10: #{tpu_custom_call.1} parent=1 // pred_check
      _
    $region11: #{tpu_custom_call.1} parent=1 // pred_check_branch
      %17 = sbr.rel (0) target = $region13
    $region12: #{tpu_custom_call.1} parent=1 // pred_region
      %s19 = ssub.s32 128, 128
      %20 = vsyncadd [#allocation5], %s19
      %s22 = sshll.u32 [#allocation4], 4
      %s23 = int_to_ptr.vmem [resolvable:$true] %s22
      %25 = dma.hbm_to_vmem [thread:$0]  %s2, 128, %s23, [#allocation5]
    $region13: #{tpu_custom_call.1} parent=1 // pred_fallthru
      _
    // Predicated region
    $region14: #{tpu_custom_call.1} parent=1 // pred_check
      _
    $region15: #{tpu_custom_call.1} parent=1 // pred_check_branch
      %27 = sbr.rel (0) target = $region17
    $region16: #{tpu_custom_call.1} parent=1 // pred_region
      %28 = dma.done [#allocation5], 128
    $region17: #{tpu_custom_call.1} parent=1 // pred_fallthru
      _
    %s29 = sld [smem:[#allocation2]]
    %s30 = sld [smem:[#allocation3]]
    %v31 = vld [vmem:[#allocation4] sm:$0xff]
    %v32 = vstv %s29
    %v33 = vmul.f32 %v32, %v31
    %v34 = vstv %s30
    %v35 = vadd.f32 %v33, %v34
    %36 = vst [vmem:[#allocation7] sm:$0xff] %v35
    // Predicated region
    $region18: #{tpu_custom_call.1} parent=1 // pred_check
      _
    $region19: #{tpu_custom_call.1} parent=1 // pred_check_branch
      %38 = sbr.rel (0) target = $region21
    $region20: #{tpu_custom_call.1} parent=1 // pred_region
      %s40 = ssub.s32 128, 128
      %41 = vsyncadd [#allocation6], %s40
      %s43 = sshll.u32 [#allocation7], 4
      %s44 = int_to_ptr.vmem [resolvable:$true] %s43
      %46 = dma.vmem_to_hbm [thread:$0]  %s44, 128, %s3, [#allocation6]
    $region21: #{tpu_custom_call.1} parent=1 // pred_fallthru
      _
    // Predicated region
    $region22: #{tpu_custom_call.1} parent=1 // pred_check
      _
    $region23: #{tpu_custom_call.1} parent=1 // pred_check_branch
      %48 = sbr.rel (0) target = $region25
    $region24: #{tpu_custom_call.1} parent=1 // pred_region
      %49 = dma.done [#allocation6], 128
    $region25: #{tpu_custom_call.1} parent=1 // pred_fallthru
      _
    %50 = vsyncpa [#allocation5], 1
    %51 = vsyncpa [#allocation6], 1

</llo_original>
